<compile_context>
chip_gen: v5e
topology: v5e:2x2
jax: 0.10.0
libtpu: 0.0.40
codegen_flags: <defaults>
</compile_context>

<pallas_src>
import jax
import jax.numpy as jnp
from jax.experimental import pallas as pl
from jax.experimental.pallas import tpu as pltpu


def _transpose_tile_kernel(x_ref, o_ref):
    # x_ref: (T_C, T_HW)  ->  o_ref: (T_HW, T_C)
    o_ref[...] = x_ref[...].T


def _pick_tile(dim: int, target: int) -> int:
    """Full extent if it fits in `target`, else the largest 128-multiple <= target."""
    if dim <= target:
        return dim
    return max((target // 128) * 128, 128)


def bchw2bhwc(x, *, tile_hw: int = 512, tile_c: int = 512):
    """x: (B, C, H, W) -> (B, H, W, C), bit-exact permutation."""
    B, C, H, W = x.shape
    HW = H * W

    # Free, contiguous reshape: collapse the spatial axes.
    x2 = x.reshape(B, C, HW)

    t_hw = _pick_tile(HW, tile_hw)  # lane dim of input tile, sublane dim of output tile
    t_c = _pick_tile(C, tile_c)     # sublane dim of input tile, lane dim of output tile
    # NOTE: when C < 128 the output lane dim is lane-sparse (e.g. C=4 uses
    # 4/128 of each store lane); this is inherent to BHWC with tiny C.
    # TODO(synk): pack small-C channels into 32-bit containers (pltpu.bitcast)
    # to densify stores if this ever becomes the bottleneck.

    grid = (B, pl.cdiv(HW, t_hw), pl.cdiv(C, t_c))

    out2 = pl.pallas_call(
        _transpose_tile_kernel,
        out_shape=jax.ShapeDtypeStruct((B, HW, C), x.dtype),
        grid_spec=pltpu.PrefetchScalarGridSpec(
            num_scalar_prefetch=0,
            grid=grid,
            in_specs=[
                pl.BlockSpec(
                    (pl.Squeezed(), t_c, t_hw),
                    lambda b, hw, c: (b, c, hw),
                ),
            ],
            out_specs=pl.BlockSpec(
                (pl.Squeezed(), t_hw, t_c),
                lambda b, hw, c: (b, hw, c),
            ),
        ),
        compiler_params=pltpu.CompilerParams(
            dimension_semantics=("parallel", "parallel", "parallel"),
        ),
    )(x2)

    # Free, contiguous reshape back to the 4-D BHWC layout.
    return out2.reshape(B, H, W, C)


if __name__ == "__main__":
    key = jax.random.PRNGKey(0)

    # Primary small shape consistent with the module: B=2, C=4, H=16, W=16.
    x = jax.random.normal(key, (2, 4, 16, 16), dtype=jnp.float32)
    out = jax.block_until_ready(bchw2bhwc(x))
    ref = jnp.transpose(x, (0, 2, 3, 1))
    assert out.shape == (2, 16, 16, 4), out.shape
    assert out.dtype == x.dtype
    assert jnp.array_equal(out, ref)

    # Secondary check exercising multi-tile + partial-edge-tile path
    # (HW = 900 > 512 -> 2 HW tiles, second one partial).
    key2 = jax.random.PRNGKey(0)
    x2 = jax.random.normal(key2, (2, 8, 30, 30), dtype=jnp.float32)
    out2 = jax.block_until_ready(bchw2bhwc(x2))
    ref2 = jnp.transpose(x2, (0, 2, 3, 1))
    assert out2.shape == (2, 30, 30, 8), out2.shape
    assert jnp.array_equal(out2, ref2)

    print("KERNEL_OK")
</pallas_src>

<mosaic_0001>
module attributes {stable_mosaic.version = 11 : i64} {
  func.func @_transpose_tile_kernel(%arg0: i32, %arg1: i32, %arg2: i32, %arg3: memref<1x4x256xf32, #tpu.memory_space<vmem>>, %arg4: memref<1x256x4xf32, #tpu.memory_space<vmem>>) attributes {dimension_semantics = [#tpu.dimension_semantics<parallel>, #tpu.dimension_semantics<parallel>, #tpu.dimension_semantics<parallel>], iteration_bounds = array<i64: 2, 1, 1>, scalar_prefetch = 0 : i64, scratch_operands = 0 : i64, tpu.core_type = #tpu.core_type<tc>, window_params = [{transform_indices = @transform_0, window_bounds = array<i64: 1, 4, 256>}, {transform_indices = @transform_1, window_bounds = array<i64: 1, 256, 4>}]} {
    %c0 = arith.constant 0 : index
    %c0_0 = arith.constant 0 : index
    %c0_1 = arith.constant 0 : index
    %0 = vector.load %arg3[%c0, %c0_0, %c0_1] : memref<1x4x256xf32, #tpu.memory_space<vmem>>, vector<1x4x256xf32>
    %1 = vector.shape_cast %0 : vector<1x4x256xf32> to vector<4x256xf32>
    %2 = tpu.transpose %1, [1, 0] : vector<4x256xf32> -> vector<256x4xf32>
    %c0_2 = arith.constant 0 : index
    %c0_3 = arith.constant 0 : index
    %c0_4 = arith.constant 0 : index
    %3 = vector.load %arg4[%c0_2, %c0_3, %c0_4] : memref<1x256x4xf32, #tpu.memory_space<vmem>>, vector<1x256x4xf32>
    %4 = vector.shape_cast %3 : vector<1x256x4xf32> to vector<256x4xf32>
    %5 = vector.shape_cast %2 : vector<256x4xf32> to vector<1x256x4xf32>
    tpu.vector_store %arg4[%c0_2, %c0_3, %c0_4], %5 {strides = array<i32>} : memref<1x256x4xf32, #tpu.memory_space<vmem>>, vector<1x256x4xf32>,
    return
  }
  func.func @transform_0(%arg0: i32, %arg1: i32, %arg2: i32) -> (i32, i32, i32) {
    %c0_i32 = arith.constant 0 : i32
    return %arg0, %arg2, %arg1 : i32, i32, i32
  }
  func.func @transform_1(%arg0: i32, %arg1: i32, %arg2: i32) -> (i32, i32, i32) {
    %c0_i32 = arith.constant 0 : i32
    return %arg0, %arg1, %arg2 : i32, i32, i32
  }
}

</mosaic_0001>

<llo_original>
// kernel: tpu_custom_call.1
$region0: #{tpu_custom_call.1}
  #allocation0 [shape = 'u32[]', space=smem, size = 0x4, offset = 0x4, fixed_abs, tag = 'smem constant byte address 0x4 - core index']
  #allocation1 [shape = 'u32[72,128]{1,0:T(1,128)}', space=vmem, size = 0x9000, scoped, tag = 'internal scratch']
  %s0 = inlined_call_operand.hbm [shape: f32[2,4,256], index: 0, kind: input, shape index: {}]
  %s1 = inlined_call_operand.vmem [shape: f32[2,256,4], index: 1, kind: output, shape index: {}]
  %s2 = sld [smem:[#allocation0]]
  $region41: #{tpu_custom_call.1} parent=0
    _
  %s4 = ssub.s32 1, %s2
  %s5 = scalar_select 0, %s4, %s2
  $region1: #{tpu_custom_call.1} parent=0
    #allocation2 [shape = 'u8[8192]{0}', space=vmem, size = 0x2000, scoped, tag = 'input window, operand 0']
    #allocation3 [shape = 's32[2]{0}', space=sflag, size = 0x8, scoped, tag = 'scoped memory for tpu_custom_call.1']
    %6 = vsyncpa [#allocation3], 0
    %s7 = scalar_lea.sflag [#allocation3], 1
    %8 = vsyncpa %s7, 0
    loop: start=0, step=1, limit=4
    $region2: #{tpu_custom_call.1} parent=1 // loop_pre_header
      _
    $region3: #{tpu_custom_call.1} parent=1 // loop_header
      %s10 = sphi 0, %s14
      %p11 = scmp.ge.s32.totalorder %s10, 4
      %s17 = sphi 0, %s36
      %s18 = sphi 0, %s32
      %s19 = sphi 0, %s28
      %s20 = sphi 0, %s17
      %s21 = sphi 0, %s18
      %s22 = sphi 0, %s19
      %s23 = sphi 0, %s20
      %s24 = sphi 0, %s21
      %s25 = sphi 0, %s22
      %s43 = sphi 0, %s45
      %s46 = sphi 0, %s43
      %s47 = sphi 0, %s46
      %s63 = sphi 0, %s47
      %s73 = sphi 0, %s75
      %s76 = sphi 0, %s73
      %s77 = sphi 0, %s76
      %s93 = sphi 0, %s77
    $region4: #{tpu_custom_call.1} parent=1 // loop_header_branch
      %13 = sbr.rel (%p11) target = $region8
    $region5: #{tpu_custom_call.1} parent=1 // loop_body
      %s15 = ssub.s32 %s10, 1
      %s16 = ssub.s32 %s10, 2
      %s26 = sadd.s32 1, %s19
      %p27 = scmp.ge.s32.totalorder %s26, 1
      %s28 = scalar_select %p27, 0, %s26
      %s29 = sadd.s32 1, %s18
      %s30 = scalar_select %p27, %s29, %s18
      %p31 = scmp.ge.s32.totalorder %s30, 1
      %s32 = scalar_select %p31, 0, %s30
      %s33 = sadd.s32 1, %s17
      %s34 = scalar_select %p31, %s33, %s17
      %p35 = scmp.ge.s32.totalorder %s34, 2
      %s36 = scalar_select %p35, 0, %s34
      %s37 = ssub.s32 %s17, %s36
      %s38 = ssub.s32 %s19, %s28
      %s39 = sor.u32 %s37, %s38
      %s40 = ssub.s32 %s18, %s32
      %s41 = sor.u32 %s39, %s40
      %p42 = scmp.eq.s32.totalorder %s41, 0
      %s44 = sadd.s32 %s43, 1
      %s45 = scalar_select %p42, %s43, %s44
      %p48 = pneg %p42
      %p49 = scmp.eq.s32.totalorder %s10, 1
      %p50 = por %p48, %p49
      %p51 = scmp.ne.s32.totalorder %s43, %s46
      %p52 = scmp.eq.s32.totalorder %s10, 0
      %p53 = por %p51, %p52
      %p54 = scmp.ne.s32.totalorder %s43, %s46
      %p55 = scmp.eq.s32.totalorder %s15, 1
      %p56 = por %p54, %p55
      %p57 = scmp.ne.s32.totalorder %s46, %s47
      %p58 = scmp.eq.s32.totalorder %s15, 0
      %p59 = por %p57, %p58
      %p60 = scmp.ne.s32.totalorder %s46, %s47
      %p61 = scmp.eq.s32.totalorder %s16, 1
      %p62 = por %p60, %p61
      %p64 = scmp.ne.s32.totalorder %s47, %s63
      %p65 = scmp.eq.s32.totalorder %s16, 0
      %p66 = por %p64, %p65
      %s67 = ssub.s32 %s17, %s36
      %s68 = ssub.s32 %s18, %s32
      %s69 = sor.u32 %s67, %s68
      %s70 = ssub.s32 %s19, %s28
      %s71 = sor.u32 %s69, %s70
      %p72 = scmp.eq.s32.totalorder %s71, 0
      %s74 = sadd.s32 %s73, 1
      %s75 = scalar_select %p72, %s73, %s74
      %p78 = pneg %p72
      %p79 = scmp.eq.s32.totalorder %s10, 1
      %p80 = por %p78, %p79
      %p81 = scmp.ne.s32.totalorder %s73, %s76
      %p82 = scmp.eq.s32.totalorder %s10, 0
      %p83 = por %p81, %p82
      %p84 = scmp.ne.s32.totalorder %s73, %s76
      %p85 = scmp.eq.s32.totalorder %s15, 1
      %p86 = por %p84, %p85
      %p87 = scmp.ne.s32.totalorder %s76, %s77
      %p88 = scmp.eq.s32.totalorder %s15, 0
      %p89 = por %p87, %p88
      %p90 = scmp.ne.s32.totalorder %s76, %s77
      %p91 = scmp.eq.s32.totalorder %s16, 1
      %p92 = por %p90, %p91
      %p94 = scmp.ne.s32.totalorder %s77, %s93
      %p95 = scmp.eq.s32.totalorder %s16, 0
      %p96 = por %p94, %p95
      %p97 = scmp.le.s32.totalorder 1, %s10
      %p98 = scmp.lt.s32.totalorder %s10, 3
      %p99 = pnand %p97, %p98
      %p100 = pneg %p99
      // Predicated region
      $region9: #{tpu_custom_call.1} parent=5 // pred_check
        _
      $region10: #{tpu_custom_call.1} parent=5 // pred_check_branch
        %102 = sbr.rel (%p99) target = $region12
      $region11: #{tpu_custom_call.1} parent=5 // pred_region
        %s103 = ssub.s32 %s10, 1
      $region12: #{tpu_custom_call.1} parent=5 // pred_fallthru
        _
      %p104 = scmp.lt.s32.totalorder %s10, 2
      // Predicated region
      $region13: #{tpu_custom_call.1} parent=5 // pred_check
        %p105 = pneg %p104
      $region14: #{tpu_custom_call.1} parent=5 // pred_check_branch
        %107 = sbr.rel (%p105) target = $region16
      $region15: #{tpu_custom_call.1} parent=5 // pred_region
        // Predicated region
        $region17: #{tpu_custom_call.1} parent=15 // pred_check
          %p108 = pneg %p53
        $region18: #{tpu_custom_call.1} parent=15 // pred_check_branch
          %110 = sbr.rel (%p108) target = $region20
        $region19: #{tpu_custom_call.1} parent=15 // pred_region
          %s111 = sand.u32 %s43, 1
          %s112 = scalar_lea.sflag [#allocation3], %s111
          %s113 = sand.u32 %s43, 1
          %s114 = smul.addr %s113, 8
          %s115 = scalar_lea.vmem [#allocation2], %s114
          %s116 = smul.u32 2, %s18
          %118 = vsyncadd %s112, 0
          %s119 = smul.addr %s19, 2
          %s120 = sadd.s32 %s116, %s119
          %s121 = smul.addr %s17, 2
          %s122 = sadd.s32 %s120, %s121
          %s123 = smul.addr %s122, 4
          %s124 = scalar_lea.hbm %s0, %s123
          %s126 = sshll.u32 %s124, 4
          %s127 = int_to_ptr.hbm [resolvable:$true] %s126
          %s128 = sshll.u32 %s115, 4
          %s129 = int_to_ptr.vmem [resolvable:$true] %s128
          %131 = dma.hbm_to_vmem [thread:$0]  %s127, 128, %s129, %s112
        $region20: #{tpu_custom_call.1} parent=15 // pred_fallthru
          _
      $region16: #{tpu_custom_call.1} parent=5 // pred_fallthru
        _
      %p132 = scmp.le.s32.totalorder 1, %s10
      %p133 = scmp.lt.s32.totalorder %s10, 3
      %p134 = pnand %p132, %p133
      %p135 = pneg %p134
      // Predicated region
      $region21: #{tpu_custom_call.1} parent=5 // pred_check
        _
      $region22: #{tpu_custom_call.1} parent=5 // pred_check_branch
        %137 = sbr.rel (%p134) target = $region24
      $region23: #{tpu_custom_call.1} parent=5 // pred_region
        %s138 = ssub.s32 %s10, 1
        %s139 = sand.u32 %s46, 1
        %s140 = scalar_lea.sflag [#allocation3], %s139
        %s141 = sand.u32 %s46, 1
        %s142 = smul.addr %s141, 8
        %s143 = scalar_lea.vmem [#allocation2], %s142
        // Predicated region
        $region25: #{tpu_custom_call.1} parent=23 // pred_check
          %p144 = pneg %p59
        $region26: #{tpu_custom_call.1} parent=23 // pred_check_branch
          %146 = sbr.rel (%p144) target = $region28
        $region27: #{tpu_custom_call.1} parent=23 // pred_region
          %148 = dma.done %s140, 128
        $region28: #{tpu_custom_call.1} parent=23 // pred_fallthru
          _
        %s149 = sand.u32 %s46, 1
        %s150 = scalar_lea.sflag [#allocation3], %s149
        %s151 = sand.u32 %s46, 1
        %s152 = smul.addr %s151, 8
        %s153 = scalar_lea.vmem [#allocation2], %s152
        %p154 = pneg %p59
        %p155 = pneg %p56
        %p156 = pneg %p89
        %p157 = pneg %p86
        %s158 = smul.u32 32, %s21
        %p159 = scmp.lt.s32.totalorder %s20, 1
        %s160 = scalar_select %p159, %s20, 1
        %p161 = scmp.lt.s32.totalorder %s158, 31
        %s162 = scalar_select %p161, %s158, 31
        %p163 = scmp.lt.s32.totalorder %s22, 0
        %s164 = scalar_select %p163, %s22, 0
        %s165 = sadd.s32 %s164, %s162
        %s166 = smul.addr %s160, 32
        %s167 = sadd.s32 %s165, %s166
        %s168 = smul.addr %s167, 8
        %s169 = scalar_lea.vmem %s1, %s168
        %s170 = smul.u32 2, %s21
        %s171 = smul.u32 32, %s21
        %p172 = scmp.lt.s32.totalorder %s20, 1
        %s173 = scalar_select %p172, %s20, 1
        %p174 = scmp.lt.s32.totalorder %s171, 31
        %s175 = scalar_select %p174, %s171, 31
        %p176 = scmp.lt.s32.totalorder %s22, 0
        %s177 = scalar_select %p176, %s22, 0
        %s178 = sadd.s32 %s177, %s175
        %s179 = smul.addr %s173, 32
        %s180 = sadd.s32 %s178, %s179
        %s181 = smul.addr %s180, 8
        %s182 = scalar_lea.vmem %s1, %s181
        %s183 = smul.u32 32, %s21
        %v184 = vld [vmem:[%s143] sm:$0xff]
        %186 = vst [vmem:[#allocation1] ss:$2 sm:$0xff] %v184
        %v187 = vld.sshfl [vmem:[#allocation1] sm:$0xff pattern:$0x75316420]
        %v188 = vld.sshfl [vmem:[#allocation1 + $0x8] sm:$0xff pattern:$0x75316420]
        %191 = vxpose.xlu0.b32.start [1/16] %v187, 128
        %192 = vxpose.xlu0.b32.cont [2/16] 0.0, 128
        %193 = vxpose.xlu0.b32.cont [3/16] 0.0, 128
        %194 = vxpose.xlu0.b32.cont [4/16] 0.0, 128
        %195 = vxpose.xlu0.b32.cont [5/16] 0.0, 128
        %196 = vxpose.xlu0.b32.cont [6/16] 0.0, 128
        %197 = vxpose.xlu0.b32.cont [7/16] 0.0, 128
        %198 = vxpose.xlu0.b32.cont [8/16] 0.0, 128
        %199 = vxpose.xlu0.b32.cont [9/16] 0.0, 128
        %200 = vxpose.xlu0.b32.cont [10/16] 0.0, 128
        %201 = vxpose.xlu0.b32.cont [11/16] 0.0, 128
        %202 = vxpose.xlu0.b32.cont [12/16] 0.0, 128
        %203 = vxpose.xlu0.b32.cont [13/16] 0.0, 128
        %204 = vxpose.xlu0.b32.cont [14/16] 0.0, 128
        %205 = vxpose.xlu0.b32.cont [15/16] 0.0, 128
        %206 = vxpose.xlu0.b32.end [16/16] 0.0, 128
        %v207 = vpop.trf.xlu0
        %v208 = vpop.trf.xlu0
        %v209 = vpop.trf.xlu0
        %v210 = vpop.trf.xlu0
        %v211 = vpop.trf.xlu0
        %v212 = vpop.trf.xlu0
        %v213 = vpop.trf.xlu0
        %v214 = vpop.trf.xlu0
        %v215 = vpop.trf.xlu0
        %v216 = vpop.trf.xlu0
        %v217 = vpop.trf.xlu0
        %v218 = vpop.trf.xlu0
        %v219 = vpop.trf.xlu0
        %v220 = vpop.trf.xlu0
        %v221 = vpop.trf.xlu0
        %v222 = vpop.trf.xlu0
        %223 = vxpose.xlu0.b32.start [1/16] %v188, 128
        %224 = vxpose.xlu0.b32.cont [2/16] 0.0, 128
        %225 = vxpose.xlu0.b32.cont [3/16] 0.0, 128
        %226 = vxpose.xlu0.b32.cont [4/16] 0.0, 128
        %227 = vxpose.xlu0.b32.cont [5/16] 0.0, 128
        %228 = vxpose.xlu0.b32.cont [6/16] 0.0, 128
        %229 = vxpose.xlu0.b32.cont [7/16] 0.0, 128
        %230 = vxpose.xlu0.b32.cont [8/16] 0.0, 128
        %231 = vxpose.xlu0.b32.cont [9/16] 0.0, 128
        %232 = vxpose.xlu0.b32.cont [10/16] 0.0, 128
        %233 = vxpose.xlu0.b32.cont [11/16] 0.0, 128
        %234 = vxpose.xlu0.b32.cont [12/16] 0.0, 128
        %235 = vxpose.xlu0.b32.cont [13/16] 0.0, 128
        %236 = vxpose.xlu0.b32.cont [14/16] 0.0, 128
        %237 = vxpose.xlu0.b32.cont [15/16] 0.0, 128
        %238 = vxpose.xlu0.b32.end [16/16] 0.0, 128
        %v239 = vpop.trf.xlu0
        %v240 = vpop.trf.xlu0
        %v241 = vpop.trf.xlu0
        %v242 = vpop.trf.xlu0
        %v243 = vpop.trf.xlu0
        %v244 = vpop.trf.xlu0
        %v245 = vpop.trf.xlu0
        %v246 = vpop.trf.xlu0
        %v247 = vpop.trf.xlu0
        %v248 = vpop.trf.xlu0
        %v249 = vpop.trf.xlu0
        %v250 = vpop.trf.xlu0
        %v251 = vpop.trf.xlu0
        %v252 = vpop.trf.xlu0
        %v253 = vpop.trf.xlu0
        %v254 = vpop.trf.xlu0
        %vm255 = vcmask 31744
        %256 = vst.msk [vmem:[%s182] sm:$0xff] %vm255, %v207
        %257 = vst.msk [vmem:[%s182 + $0x8] sm:$0xff] %vm255, %v208
        %258 = vst.msk [vmem:[%s182 + $0x10] sm:$0xff] %vm255, %v209
        %259 = vst.msk [vmem:[%s182 + $0x18] sm:$0xff] %vm255, %v210
        %260 = vst.msk [vmem:[%s182 + $0x20] sm:$0xff] %vm255, %v211
        %261 = vst.msk [vmem:[%s182 + $0x28] sm:$0xff] %vm255, %v212
        %262 = vst.msk [vmem:[%s182 + $0x30] sm:$0xff] %vm255, %v213
        %263 = vst.msk [vmem:[%s182 + $0x38] sm:$0xff] %vm255, %v214
        %264 = vst.msk [vmem:[%s182 + $0x40] sm:$0xff] %vm255, %v215
        %265 = vst.msk [vmem:[%s182 + $0x48] sm:$0xff] %vm255, %v216
        %266 = vst.msk [vmem:[%s182 + $0x50] sm:$0xff] %vm255, %v217
        %267 = vst.msk [vmem:[%s182 + $0x58] sm:$0xff] %vm255, %v218
        %268 = vst.msk [vmem:[%s182 + $0x60] sm:$0xff] %vm255, %v219
        %269 = vst.msk [vmem:[%s182 + $0x68] sm:$0xff] %vm255, %v220
        %270 = vst.msk [vmem:[%s182 + $0x70] sm:$0xff] %vm255, %v221
        %271 = vst.msk [vmem:[%s182 + $0x78] sm:$0xff] %vm255, %v222
        %272 = vst.msk [vmem:[%s182 + $0x80] sm:$0xff] %vm255, %v239
        %273 = vst.msk [vmem:[%s182 + $0x88] sm:$0xff] %vm255, %v240
        %274 = vst.msk [vmem:[%s182 + $0x90] sm:$0xff] %vm255, %v241
        %275 = vst.msk [vmem:[%s182 + $0x98] sm:$0xff] %vm255, %v242
        %276 = vst.msk [vmem:[%s182 + $0xa0] sm:$0xff] %vm255, %v243
        %277 = vst.msk [vmem:[%s182 + $0xa8] sm:$0xff] %vm255, %v244
        %278 = vst.msk [vmem:[%s182 + $0xb0] sm:$0xff] %vm255, %v245
        %279 = vst.msk [vmem:[%s182 + $0xb8] sm:$0xff] %vm255, %v246
        %280 = vst.msk [vmem:[%s182 + $0xc0] sm:$0xff] %vm255, %v247
        %281 = vst.msk [vmem:[%s182 + $0xc8] sm:$0xff] %vm255, %v248
        %282 = vst.msk [vmem:[%s182 + $0xd0] sm:$0xff] %vm255, %v249
        %283 = vst.msk [vmem:[%s182 + $0xd8] sm:$0xff] %vm255, %v250
        %284 = vst.msk [vmem:[%s182 + $0xe0] sm:$0xff] %vm255, %v251
        %285 = vst.msk [vmem:[%s182 + $0xe8] sm:$0xff] %vm255, %v252
        %286 = vst.msk [vmem:[%s182 + $0xf0] sm:$0xff] %vm255, %v253
        %287 = vst.msk [vmem:[%s182 + $0xf8] sm:$0xff] %vm255, %v254
        %s288 = smul.u32 32, %s21
        %p289 = scmp.lt.s32.totalorder %s20, 1
        %s290 = scalar_select %p289, %s20, 1
        %p291 = scmp.lt.s32.totalorder %s288, 31
        %s292 = scalar_select %p291, %s288, 31
        %p293 = scmp.lt.s32.totalorder %s22, 0
        %s294 = scalar_select %p293, %s22, 0
        %s295 = sadd.s32 %s294, %s292
        %s296 = smul.addr %s290, 32
        %s297 = sadd.s32 %s295, %s296
        %s298 = smul.addr %s297, 8
        %s299 = scalar_lea.vmem %s1, %s298
        // Predicated region
        $region29: #{tpu_custom_call.1} parent=23 // pred_check
          %p300 = pneg %p86
        $region30: #{tpu_custom_call.1} parent=23 // pred_check_branch
          %302 = sbr.rel (%p300) target = $region32
        $region31: #{tpu_custom_call.1} parent=23 // pred_region
          %s303 = smul.u32 32, %s21
        $region32: #{tpu_custom_call.1} parent=23 // pred_fallthru
          _
      $region24: #{tpu_custom_call.1} parent=5 // pred_fallthru
        _
      %p304 = scmp.le.s32.totalorder 2, %s10
      // Predicated region
      $region33: #{tpu_custom_call.1} parent=5 // pred_check
        %p305 = pneg %p304
      $region34: #{tpu_custom_call.1} parent=5 // pred_check_branch
        %307 = sbr.rel (%p305) target = $region36
      $region35: #{tpu_custom_call.1} parent=5 // pred_region
        %s308 = ssub.s32 %s10, 2
        // Predicated region
        $region37: #{tpu_custom_call.1} parent=35 // pred_check
          %p309 = pneg %p92
        $region38: #{tpu_custom_call.1} parent=35 // pred_check_branch
          %311 = sbr.rel (%p309) target = $region40
        $region39: #{tpu_custom_call.1} parent=35 // pred_region
          %s312 = smul.u32 32, %s24
          %p313 = scmp.lt.s32.totalorder %s23, 1
          %s314 = scalar_select %p313, %s23, 1
          %p315 = scmp.lt.s32.totalorder %s312, 31
          %s316 = scalar_select %p315, %s312, 31
          %p317 = scmp.lt.s32.totalorder %s25, 0
          %s318 = scalar_select %p317, %s25, 0
          %s319 = sadd.s32 %s318, %s316
          %s320 = smul.addr %s314, 32
          %s321 = sadd.s32 %s319, %s320
          %s322 = smul.addr %s321, 8
          %s323 = scalar_lea.vmem %s1, %s322
        $region40: #{tpu_custom_call.1} parent=35 // pred_fallthru
          _
      $region36: #{tpu_custom_call.1} parent=5 // pred_fallthru
        _
    $region6: #{tpu_custom_call.1} parent=1 // loop_footer
      %s14 = sadd.s32 1, %s10
    $region7: #{tpu_custom_call.1} parent=1 // loop_footer_branch
      %9 = sbr.rel target = $region3
    $region8: #{tpu_custom_call.1} parent=1 // loop_exit
      _
    %324 = vsyncpa [#allocation3], 1
    %s325 = scalar_lea.sflag [#allocation3], 1
    %326 = vsyncpa %s325, 1

</llo_original>
